<compile_context>
chip_gen: v6e
topology: v6e:2x2x1
jax: 0.10.0
libtpu: 0.0.40
codegen_flags: <defaults>
</compile_context>

<pallas_src>
import jax
import jax.numpy as jnp
from jax import lax
from jax.experimental import pallas as pl
from jax.experimental.pallas import tpu as pltpu

EMB_DIM = 200
EMB_PAD = 256          # padded K for the MXU (200 lanes pad to 256 anyway)
HIDDEN = 128
NUM_LAYERS = 2
BI_NUM = 2             # bidirectional

_GATE_BLOCK_BUDGET = 2 * 1024 * 1024   # bytes per gate block per direction


# ----------------------------------------------------------------------------
# Tile-size pickers (VMEM-budget aware, alignment-safe fallbacks).
# ----------------------------------------------------------------------------
def _pick_proj_rows(M):
    for tm in (512, 256, 128, 64, 32, 16):
        if M % tm == 0:
            return tm
    return M   # full-array row block is always BlockSpec-legal


def _pick_time_block(T, B):
    """Pick Tc (timesteps per recurrent grid step) and the activation dtype."""
    def fits(tc, itemsize):
        return tc * B * 4 * HIDDEN * itemsize <= _GATE_BLOCK_BUDGET or tc == 1

    for tc in range(min(T, 16), 0, -1):      # bf16 rows want % 16 alignment
        if T % tc == 0 and (tc * B) % 16 == 0 and fits(tc, 2):
            return tc, jnp.bfloat16
    for tc in range(min(T, 16), 0, -1):      # f32 rows only need % 8
        if T % tc == 0 and (tc * B) % 8 == 0 and fits(tc, 4):
            return tc, jnp.float32
    # Awkward T/B: one full-sequence block (always legal); the kernel then
    # iterates with a non-unrolled fori_loop so the body stays small.
    return T, jnp.bfloat16


def _gate_block_spec(shape, index_map, depth):
    """Gate-stream BlockSpec with optional deeper pipelining."""
    if depth > 2:
        try:
            return pl.BlockSpec(shape, index_map,
                                pipeline_mode=pl.Buffered(depth))
        except Exception:   # older jax without pipeline_mode: default buffering
            pass
    return pl.BlockSpec(shape, index_map)


# ----------------------------------------------------------------------------
# Hoisted input projection: gates_x = x @ [Wih_f^T | Wih_b^T] + [b_f | b_b]
# Row-tiled over T*B, "parallel" grid (shards across TCs on v7x).
# ----------------------------------------------------------------------------
def _make_proj_kernel(n_x):
    def kernel(*refs):
        x_refs = refs[:n_x]
        w_ref, b_ref, gf_ref, gb_ref = refs[n_x:]
        if n_x == 1:
            x = x_refs[0][...].astype(jnp.bfloat16)
        else:
            # Lane-concat the fwd/bwd hidden halves -> one K=256 MXU pass and
            # no inter-layer concatenate pass in HBM.
            x = jnp.concatenate([r[...].astype(jnp.bfloat16) for r in x_refs],
                                axis=1)
        g = jnp.dot(x, w_ref[...], preferred_element_type=jnp.float32) + b_ref[...]
        G = gf_ref.shape[-1]
        gf_ref[...] = g[:, :G].astype(gf_ref.dtype)
        gb_ref[...] = g[:, G:].astype(gb_ref.dtype)
    return kernel


def input_projection(xs, w_both, b_both, out_dtype):
    """gates_x for both directions of one layer, row-tiled over T*B rows.

    xs:     tuple of [M, Din_i] inputs (features concatenated in-kernel)
    w_both: [sum(Din_i), 8H] bf16  ([W_ih_f^T | W_ih_b^T], pre-padded/packed)
    b_both: [1, 8H] f32            (b_ih + b_hh per direction)
    Returns (gx_f, gx_b), each [M, 4H] of out_dtype, biases folded in.
    """
    M = xs[0].shape[0]
    G4 = w_both.shape[1] // 2
    TM = _pick_proj_rows(M)
    in_specs = [pl.BlockSpec((TM, x.shape[1]), lambda i: (i, 0)) for x in xs]
    in_specs += [pl.BlockSpec(w_both.shape, lambda i: (0, 0)),
                 pl.BlockSpec(b_both.shape, lambda i: (0, 0))]
    return pl.pallas_call(
        _make_proj_kernel(len(xs)),
        out_shape=(jax.ShapeDtypeStruct((M, G4), out_dtype),
                   jax.ShapeDtypeStruct((M, G4), out_dtype)),
        grid=(M // TM,),
        in_specs=in_specs,
        out_specs=[pl.BlockSpec((TM, G4), lambda i: (i, 0)),
                   pl.BlockSpec((TM, G4), lambda i: (i, 0))],
        compiler_params=pltpu.CompilerParams(
            dimension_semantics=("parallel",)),
    )(*xs, w_both, b_both)


# ----------------------------------------------------------------------------
# Fused bidirectional LSTM recurrence for one layer.
# Grid = (T // Tc,) sequential; h/c for both directions live stacked ([2B, H])
# in VMEM scratch; the backward direction reads/writes time-reversed blocks via
# its index_maps (no flips in HBM).
# TODO(synk): on v7x the two directions could instead be split across the two
# TensorCores (core_map / core-parallel leading axis); single fused body kept
# here since it is the right call on single-TC v5e/v6e.
# ----------------------------------------------------------------------------
def _make_bilstm_kernel(Tc, B, H, emit_seq, unrolled):
    def kernel(gxf_ref, gxb_ref, h0_ref, c0_ref, whh_ref, *rest):
        if emit_seq:
            hsf_ref, hsb_ref, hfin_ref, h_scr, c_scr = rest
        else:
            hfin_ref, h_scr, c_scr = rest

        tc = pl.program_id(0)

        @pl.when(tc == 0)
        def _():
            h_scr[...] = h0_ref[...]
            c_scr[...] = c0_ref[...]

        def step(j, h_all, c_all):
            # rows [0:B] of h_all/c_all hold the fwd state, rows [B:2B] the bwd.
            r = Tc - 1 - j
            row_f, row_b = j * B, r * B
            if not unrolled and B % 8 == 0:
                row_f = pl.multiple_of(row_f, 8)
                row_b = pl.multiple_of(row_b, 8)
            # Recurrent matmuls; W_hh streamed from the VMEM ref inside the loop
            # (not hoisted as a live value) to keep vreg pressure down.
            dot_f = jnp.dot(h_all[:B].astype(jnp.bfloat16), whh_ref[0],
                            preferred_element_type=jnp.float32)
            dot_b = jnp.dot(h_all[B:].astype(jnp.bfloat16), whh_ref[1],
                            preferred_element_type=jnp.float32)
            gf = gxf_ref[pl.ds(row_f, B), :].astype(jnp.float32) + dot_f
            gb = gxb_ref[pl.ds(row_b, B), :].astype(jnp.float32) + dot_b
            # Fuse both directions' gate math on one [2B, 4H] slab: 2x sublane
            # occupancy for the EUP sigmoid/tanh work when B is small.
            g = jnp.concatenate([gf, gb], axis=0)
            # PyTorch gate order: i, f, g, o.  All element-wise math in f32.
            i_g = jax.nn.sigmoid(g[:, 0 * H:1 * H])
            f_g = jax.nn.sigmoid(g[:, 1 * H:2 * H])
            g_g = jnp.tanh(g[:, 2 * H:3 * H])
            o_g = jax.nn.sigmoid(g[:, 3 * H:4 * H])
            c_new = f_g * c_all + i_g * g_g
            h_new = o_g * jnp.tanh(c_new)
            if emit_seq:
                hsf_ref[pl.ds(row_f, B), :] = h_new[:B].astype(hsf_ref.dtype)
                hsb_ref[pl.ds(row_b, B), :] = h_new[B:].astype(hsb_ref.dtype)
            return h_new, c_new

        h_all = h_scr[...]
        c_all = c_scr[...]
        if unrolled:                       # Tc capped at <=16 on this path
            for j in range(Tc):
                h_all, c_all = step(j, h_all, c_all)
        else:                              # fallback for awkward T: tiny body
            h_all, c_all = lax.fori_loop(
                0, Tc, lambda j, hc: step(j, hc[0], hc[1]), (h_all, c_all))
        h_scr[...] = h_all
        c_scr[...] = c_all

        # Store the final hidden states once, on the last grid step only.
        @pl.when(tc == pl.num_programs(0) - 1)
        def _():
            hfin_ref[...] = h_all

    return kernel


def bilstm_layer(gx_f, gx_b, h0, c0, whh, *, T, B, Tc, emit_seq, seq_dtype):
    """One fused bidirectional LSTM layer recurrence.

    gx_f/gx_b: [T*B, 4H] pre-projected gates (biases folded in).
    h0/c0:     [2*B, H] f32 (rows 0:B fwd init, rows B:2B bwd init).
    whh:       [2, H, 4H] bf16 (transposed W_hh for fwd, bwd).
    Returns (hs_f, hs_b, hfin) if emit_seq else hfin; hfin is [2*B, H] f32.
    """
    H = HIDDEN
    nT = T // Tc
    unrolled = Tc <= 16
    gate_bytes = Tc * B * 4 * H * jnp.dtype(gx_f.dtype).itemsize
    depth = 3 if (nT >= 3 and gate_bytes * 2 * 3 <= 6 * 2 ** 20) else 2

    in_specs = [
        _gate_block_spec((Tc * B, 4 * H), lambda t: (t, 0), depth),
        _gate_block_spec((Tc * B, 4 * H), lambda t: (nT - 1 - t, 0), depth),
        pl.BlockSpec((2 * B, H), lambda t: (0, 0)),
        pl.BlockSpec((2 * B, H), lambda t: (0, 0)),
        pl.BlockSpec((2, H, 4 * H), lambda t: (0, 0, 0)),
    ]
    out_specs = []
    out_shape = []
    if emit_seq:
        out_specs += [pl.BlockSpec((Tc * B, H), lambda t: (t, 0)),
                      pl.BlockSpec((Tc * B, H), lambda t: (nT - 1 - t, 0))]
        out_shape += [jax.ShapeDtypeStruct((T * B, H), seq_dtype),
                      jax.ShapeDtypeStruct((T * B, H), seq_dtype)]
    out_specs += [pl.BlockSpec((2 * B, H), lambda t: (0, 0))]
    out_shape += [jax.ShapeDtypeStruct((2 * B, H), jnp.float32)]

    grid_spec = pltpu.PrefetchScalarGridSpec(
        num_scalar_prefetch=0,
        grid=(nT,),
        in_specs=in_specs,
        out_specs=out_specs,
        scratch_shapes=[pltpu.VMEM((2 * B, H), jnp.float32),
                        pltpu.VMEM((2 * B, H), jnp.float32)],
    )
    outs = pl.pallas_call(
        _make_bilstm_kernel(Tc, B, H, emit_seq, unrolled),
        out_shape=tuple(out_shape),
        grid_spec=grid_spec,
        compiler_params=pltpu.CompilerParams(
            dimension_semantics=("arbitrary",)),
    )(gx_f, gx_b, h0, c0, whh)
    return outs if emit_seq else outs[0]


# ----------------------------------------------------------------------------
# Classifier head kernel: fc_cell -> log_softmax -> fc -> log_softmax.
# ----------------------------------------------------------------------------
def _head_kernel(feat_ref, w1_ref, b1_ref, w2_ref, b2_ref, out_ref):
    x = (jnp.dot(feat_ref[...], w1_ref[...], preferred_element_type=jnp.float32)
         + b1_ref[...])                                     # [B, 20]
    m1 = jnp.max(x, axis=1, keepdims=True)
    x = x - (m1 + jnp.log(jnp.sum(jnp.exp(x - m1), axis=1, keepdims=True)))
    y = (jnp.dot(x, w2_ref[...], preferred_element_type=jnp.float32)
         + b2_ref[...])                                     # [B, classes]
    m2 = jnp.max(y, axis=1, keepdims=True)
    y = y - (m2 + jnp.log(jnp.sum(jnp.exp(y - m2), axis=1, keepdims=True)))
    out_ref[...] = y


def classifier_head(feat, w1t, b1, w2t, b2):
    """feat: [B, 2H]; w1t: [2H, 20]; b1: [1, 20]; w2t: [20, C]; b2: [1, C]."""
    B, F = feat.shape
    M = w1t.shape[1]
    C = w2t.shape[1]
    return pl.pallas_call(
        _head_kernel,
        out_shape=jax.ShapeDtypeStruct((B, C), jnp.float32),
        grid=(1,),
        in_specs=[
            pl.BlockSpec((B, F), lambda i: (0, 0)),
            pl.BlockSpec((F, M), lambda i: (0, 0)),
            pl.BlockSpec((1, M), lambda i: (0, 0)),
            pl.BlockSpec((M, C), lambda i: (0, 0)),
            pl.BlockSpec((1, C), lambda i: (0, 0)),
        ],
        out_specs=pl.BlockSpec((B, C), lambda i: (0, 0)),
        compiler_params=pltpu.CompilerParams(
            dimension_semantics=("parallel",)),
    )(feat, w1t, b1, w2t, b2)


# ----------------------------------------------------------------------------
# One-time weight repacking (hoisted out of the forward pass).
# ----------------------------------------------------------------------------
def prepare_weights(params):
    prep = {}
    emb = params["emb"]
    V = emb.shape[0]
    emb_p = jnp.zeros((V, EMB_PAD), jnp.float32).at[:, :EMB_DIM].set(emb)
    prep["emb"] = emb_p.astype(jnp.bfloat16)   # bf16 gather, clean K=256
    for layer in range(NUM_LAYERS):
        wih_f, whh_f, bih_f, bhh_f = params[f"lstm_l{layer}_fwd"]
        wih_b, whh_b, bih_b, bhh_b = params[f"lstm_l{layer}_bwd"]
        d_in = wih_f.shape[1]
        d_pad = EMB_PAD if layer == 0 else d_in
        wf_t = jnp.zeros((d_pad, 4 * HIDDEN), jnp.float32).at[:d_in].set(wih_f.T)
        wb_t = jnp.zeros((d_pad, 4 * HIDDEN), jnp.float32).at[:d_in].set(wih_b.T)
        prep[f"w_ih_l{layer}"] = jnp.concatenate([wf_t, wb_t],
                                                 axis=1).astype(jnp.bfloat16)
        prep[f"b_l{layer}"] = jnp.concatenate([bih_f + bhh_f,
                                               bih_b + bhh_b]).reshape(1, -1)
        prep[f"w_hh_l{layer}"] = jnp.stack([whh_f.T,
                                            whh_b.T]).astype(jnp.bfloat16)
    prep["fc_cell_wt"] = jnp.transpose(params["fc_cell_w"])
    prep["fc_cell_b"] = params["fc_cell_b"].reshape(1, -1)
    prep["fc_wt"] = jnp.transpose(params["fc_w"])
    prep["fc_b"] = params["fc_b"].reshape(1, -1)
    return prep


# ----------------------------------------------------------------------------
# Full forward pass (use_cell=True branch of IMDBReview.forward).
# ----------------------------------------------------------------------------
def imdb_review_forward(tokens, prep, h0, c0):
    B, T = tokens.shape
    Tc, act_dtype = _pick_time_block(T, B)

    # Embedding gather stays in XLA glue; token ids are transposed BEFORE the
    # gather so no [B,T,E] activation transpose is needed afterwards.
    # Row t*B + b of the 2-D slab == (timestep t, batch b).
    x = jnp.take(prep["emb"], jnp.transpose(tokens).reshape(-1), axis=0)

    xs = (x,)
    hfin = None
    for layer in range(NUM_LAYERS):
        gx_f, gx_b = input_projection(xs, prep[f"w_ih_l{layer}"],
                                      prep[f"b_l{layer}"], act_dtype)
        last = layer == NUM_LAYERS - 1
        # PyTorch h_n/c_n ordering: index = layer * num_directions + direction.
        h0_l = jnp.concatenate([h0[2 * layer], h0[2 * layer + 1]], axis=0)
        c0_l = jnp.concatenate([c0[2 * layer], c0[2 * layer + 1]], axis=0)
        outs = bilstm_layer(gx_f, gx_b, h0_l, c0_l, prep[f"w_hh_l{layer}"],
                            T=T, B=B, Tc=Tc, emit_seq=not last,
                            seq_dtype=act_dtype)
        if last:
            hfin = outs               # [2B, H]; last-layer hseq never stored
        else:
            hs_f, hs_b, hfin = outs
            xs = (hs_f, hs_b)         # consumed directly by next projection
        # TODO(synk): nn.LSTM inter-layer dropout(p=0.2) applies only in
        # training mode; omitted here (inference semantics, no RNG match).

    # use_cell=True: feat = cat(h_n[-1], h_n[-2]) = (last-layer bwd, fwd).
    feat = jnp.concatenate([hfin[B:], hfin[:B]], axis=1)     # [B, 2H] f32
    return classifier_head(feat, prep["fc_cell_wt"], prep["fc_cell_b"],
                           prep["fc_wt"], prep["fc_b"])


# ----------------------------------------------------------------------------
# Deterministic parameter construction (shapes match nn.Module __init__).
# ----------------------------------------------------------------------------
def make_params(key, words_size, classes):
    ks = iter(jax.random.split(key, 64))
    scale = 0.05

    def rnd(shape):
        return scale * jax.random.normal(next(ks), shape, dtype=jnp.float32)

    params = {"emb": jax.random.normal(next(ks), (words_size, EMB_DIM),
                                       dtype=jnp.float32)}
    for layer in range(NUM_LAYERS):
        d_in = EMB_DIM if layer == 0 else BI_NUM * HIDDEN
        for tag in ("fwd", "bwd"):
            params[f"lstm_l{layer}_{tag}"] = (
                rnd((4 * HIDDEN, d_in)),    # w_ih
                rnd((4 * HIDDEN, HIDDEN)),  # w_hh
                rnd((4 * HIDDEN,)),         # b_ih
                rnd((4 * HIDDEN,)),         # b_hh
            )
    params["fc_cell_w"] = rnd((20, BI_NUM * HIDDEN))
    params["fc_cell_b"] = rnd((20,))
    params["fc_w"] = rnd((classes, 20))
    params["fc_b"] = rnd((classes,))
    return params


if __name__ == "__main__":
    WORDS_SIZE = 50
    SEQ_LEN = 8
    BATCH = 2
    CLASSES = 2

    root = jax.random.PRNGKey(0)
    k_tok, k_par, k_h, k_c = jax.random.split(root, 4)

    tokens = jax.random.randint(k_tok, (BATCH, SEQ_LEN), 0, WORDS_SIZE,
                                dtype=jnp.int32)
    params = make_params(k_par, WORDS_SIZE, CLASSES)
    prep = prepare_weights(params)   # one-time weight repack (hoisted)

    # init_hidden_cell(): normal(0, 1) of shape (num_layers * bi_num, B, H);
    # the in-module RNG is replaced by explicit deterministic inputs here.
    h0 = jax.random.normal(k_h, (NUM_LAYERS * BI_NUM, BATCH, HIDDEN),
                           dtype=jnp.float32)
    c0 = jax.random.normal(k_c, (NUM_LAYERS * BI_NUM, BATCH, HIDDEN),
                           dtype=jnp.float32)

    out = imdb_review_forward(tokens, prep, h0, c0)
    out = jax.block_until_ready(out)
    assert out.shape == (BATCH, CLASSES) and out.dtype == jnp.float32
    assert bool(jnp.all(jnp.isfinite(out)))
    print("KERNEL_OK")
</pallas_src>

<mosaic_0001>
module attributes {stable_mosaic.version = 11 : i64} {
  func.func @kernel(%arg0: i32, %arg1: memref<16x256xbf16, #tpu.memory_space<vmem>>, %arg2: memref<256x1024xbf16, #tpu.memory_space<vmem>>, %arg3: memref<1x1024xf32, #tpu.memory_space<vmem>>, %arg4: memref<16x512xbf16, #tpu.memory_space<vmem>>, %arg5: memref<16x512xbf16, #tpu.memory_space<vmem>>) attributes {dimension_semantics = [#tpu.dimension_semantics<parallel>], iteration_bounds = array<i64: 1>, scalar_prefetch = 0 : i64, scratch_operands = 0 : i64, tpu.core_type = #tpu.core_type<tc>, window_params = [{transform_indices = @transform_0, window_bounds = array<i64: 16, 256>}, {pipeline_mode = #tpu.pipeline_mode<synchronous>, transform_indices = @transform_1, window_bounds = array<i64: 256, 1024>}, {pipeline_mode = #tpu.pipeline_mode<synchronous>, transform_indices = @transform_2, window_bounds = array<i64: 1, 1024>}, {transform_indices = @transform_3, window_bounds = array<i64: 16, 512>}, {transform_indices = @transform_4, window_bounds = array<i64: 16, 512>}]} {
    %c0 = arith.constant 0 : index
    %c0_0 = arith.constant 0 : index
    %0 = vector.load %arg1[%c0, %c0_0] : memref<16x256xbf16, #tpu.memory_space<vmem>>, vector<16x256xbf16>
    %c0_1 = arith.constant 0 : index
    %c0_2 = arith.constant 0 : index
    %1 = vector.load %arg2[%c0_1, %c0_2] : memref<256x1024xbf16, #tpu.memory_space<vmem>>, vector<256x1024xbf16>
    %cst = arith.constant dense<0.000000e+00> : vector<16x1024xf32>
    %2 = tpu.matmul %0, %1, %cst {dimension_numbers = #tpu.dot_dimension_numbers<[1], [0], [0], [1], [0, 0, 1, 1], [], []>} : vector<16x256xbf16>, vector<256x1024xbf16>, vector<16x1024xf32> -> vector<16x1024xf32>
    %c0_3 = arith.constant 0 : index
    %c0_4 = arith.constant 0 : index
    %3 = vector.load %arg3[%c0_3, %c0_4] : memref<1x1024xf32, #tpu.memory_space<vmem>>, vector<1x1024xf32>
    %4 = vector.broadcast %3 : vector<1x1024xf32> to vector<16x1024xf32>
    %5 = arith.addf %2, %4 : vector<16x1024xf32>
    %6 = vector.extract_strided_slice %5 {offsets = [0, 0], sizes = [16, 512], strides = [1, 1]} : vector<16x1024xf32> to vector<16x512xf32>
    %7 = arith.truncf %6 : vector<16x512xf32> to vector<16x512xbf16>
    %c0_5 = arith.constant 0 : index
    %c0_6 = arith.constant 0 : index
    %8 = vector.load %arg4[%c0_5, %c0_6] : memref<16x512xbf16, #tpu.memory_space<vmem>>, vector<16x512xbf16>
    tpu.vector_store %arg4[%c0_5, %c0_6], %7 {strides = array<i32>} : memref<16x512xbf16, #tpu.memory_space<vmem>>, vector<16x512xbf16>,
    %9 = vector.extract_strided_slice %5 {offsets = [0, 512], sizes = [16, 512], strides = [1, 1]} : vector<16x1024xf32> to vector<16x512xf32>
    %10 = arith.truncf %9 : vector<16x512xf32> to vector<16x512xbf16>
    %c0_7 = arith.constant 0 : index
    %c0_8 = arith.constant 0 : index
    %11 = vector.load %arg5[%c0_7, %c0_8] : memref<16x512xbf16, #tpu.memory_space<vmem>>, vector<16x512xbf16>
    tpu.vector_store %arg5[%c0_7, %c0_8], %10 {strides = array<i32>} : memref<16x512xbf16, #tpu.memory_space<vmem>>, vector<16x512xbf16>,
    return
  }
  func.func @transform_0(%arg0: i32) -> (i32, i32) {
    %c0_i32 = arith.constant 0 : i32
    %c0_i32_0 = arith.constant 0 : i32
    return %arg0, %c0_i32 : i32, i32
  }
  func.func @transform_1(%arg0: i32) -> (i32, i32) {
    %c0_i32 = arith.constant 0 : i32
    %c0_i32_0 = arith.constant 0 : i32
    %c0_i32_1 = arith.constant 0 : i32
    return %c0_i32, %c0_i32_0 : i32, i32
  }
  func.func @transform_2(%arg0: i32) -> (i32, i32) {
    %c0_i32 = arith.constant 0 : i32
    %c0_i32_0 = arith.constant 0 : i32
    %c0_i32_1 = arith.constant 0 : i32
    return %c0_i32, %c0_i32_0 : i32, i32
  }
  func.func @transform_3(%arg0: i32) -> (i32, i32) {
    %c0_i32 = arith.constant 0 : i32
    %c0_i32_0 = arith.constant 0 : i32
    return %arg0, %c0_i32 : i32, i32
  }
  func.func @transform_4(%arg0: i32) -> (i32, i32) {
    %c0_i32 = arith.constant 0 : i32
    %c0_i32_0 = arith.constant 0 : i32
    return %arg0, %c0_i32 : i32, i32
  }
}

</mosaic_0001>

<llo_original>
// kernel: tpu_custom_call.1
$region0: #{tpu_custom_call.1}
  #allocation0 [shape = 'u32[]', space=smem, size = 0x4, offset = 0x4, fixed_abs, tag = 'smem constant byte address 0x4 - core index']
  #allocation1 [shape = 'u32[144,128]{1,0:T(1,128)}', space=vmem, size = 0x12000, scoped, tag = 'internal scratch']
  %s0 = inlined_call_operand.hbm [shape: bf16[16,256], index: 0, kind: input, shape index: {}]
  %s1 = inlined_call_operand.hbm [shape: bf16[256,1024], index: 1, kind: input, shape index: {}]
  %s2 = inlined_call_operand.hbm [shape: f32[1,1024], index: 2, kind: input, shape index: {}]
  %s3 = inlined_call_operand.hbm [shape: bf16[16,512], index: 3, kind: output, shape index: {0}]
  %s4 = inlined_call_operand.hbm [shape: bf16[16,512], index: 4, kind: output, shape index: {1}]
  %5 = xla_tuple %s3, %s4
  %s6 = sld [smem:[#allocation0]]
  $region42: #{tpu_custom_call.1} parent=0
    _
  %s8 = ssub.s32 1, %s6
  %s9 = scalar_select 0, %s8, %s6
  $region1: #{tpu_custom_call.1} parent=0
    #allocation2 [shape = 'u8[8192]{0}', space=vmem, size = 0x2000, scoped, tag = 'input window, operand 0, single buffered']
    #allocation3 [shape = 's32[1]{0}', space=sflag, size = 0x4, scoped, tag = 'scoped memory for tpu_custom_call.1']
    #allocation4 [shape = 's32[1]{0}', space=sflag, size = 0x4, scoped, tag = 'scoped memory for tpu_custom_call.1']
    #allocation5 [shape = 'u8[524288]{0}', space=vmem, size = 0x80000, scoped, tag = 'input window, operand 1, single buffered']
    #allocation6 [shape = 's32[1]{0}', space=sflag, size = 0x4, scoped, tag = 'scoped memory for tpu_custom_call.1']
    #allocation7 [shape = 'u8[4096]{0}', space=vmem, size = 0x1000, scoped, tag = 'input window, operand 2, single buffered']
    #allocation8 [shape = 'u8[16384]{0}', space=vmem, size = 0x4000, scoped, tag = 'output window, operand 0, single buffered']
    #allocation9 [shape = 'u8[16384]{0}', space=vmem, size = 0x4000, scoped, tag = 'output window, operand 1, single buffered']
    #allocation10 [shape = 's32[1]{0}', space=sflag, size = 0x4, scoped, tag = 'scoped memory for tpu_custom_call.1']
    %10 = vsyncpa [#allocation3], 0
    %11 = vsyncpa [#allocation6], 0
    %12 = vsyncpa [#allocation4], 0
    %13 = vsyncpa [#allocation10], 0
    // Predicated region
    $region2: #{tpu_custom_call.1} parent=1 // pred_check
      _
    $region3: #{tpu_custom_call.1} parent=1 // pred_check_branch
      %15 = sbr.rel (0) target = $region5
    $region4: #{tpu_custom_call.1} parent=1 // pred_region
      %s17 = ssub.s32 256, 256
      %18 = vsyncadd [#allocation3], %s17
      %s19 = sshll.u32 [#allocation2], 4
      %s20 = int_to_ptr.vmem [resolvable:$true] %s19
      %25 = dma.hbm_to_vmem [thread:$0]  %s0, 256, %s20, [#allocation3], 128, 128, 8
    $region5: #{tpu_custom_call.1} parent=1 // pred_fallthru
      _
    // Predicated region
    $region6: #{tpu_custom_call.1} parent=1 // pred_check
      _
    $region7: #{tpu_custom_call.1} parent=1 // pred_check_branch
      %27 = sbr.rel (0) target = $region9
    $region8: #{tpu_custom_call.1} parent=1 // pred_region
      %s29 = ssub.s32 16384, 16384
      %30 = vsyncadd [#allocation6], %s29
      %s31 = sshll.u32 [#allocation5], 4
      %s32 = int_to_ptr.vmem [resolvable:$true] %s31
      %37 = dma.hbm_to_vmem [thread:$0]  %s1, 16384, %s32, [#allocation6], 512, 512, 32
    $region9: #{tpu_custom_call.1} parent=1 // pred_fallthru
      _
    // Predicated region
    $region10: #{tpu_custom_call.1} parent=1 // pred_check
      _
    $region11: #{tpu_custom_call.1} parent=1 // pred_check_branch
      %39 = sbr.rel (0) target = $region13
    $region12: #{tpu_custom_call.1} parent=1 // pred_region
      %s41 = ssub.s32 128, 128
      %42 = vsyncadd [#allocation6], %s41
      %s44 = sshll.u32 [#allocation7], 4
      %s45 = int_to_ptr.vmem [resolvable:$true] %s44
      %47 = dma.hbm_to_vmem [thread:$0]  %s2, 128, %s45, [#allocation6]
    $region13: #{tpu_custom_call.1} parent=1 // pred_fallthru
      _
    // Predicated region
    $region14: #{tpu_custom_call.1} parent=1 // pred_check
      _
    $region15: #{tpu_custom_call.1} parent=1 // pred_check_branch
      %49 = sbr.rel (0) target = $region17
    $region16: #{tpu_custom_call.1} parent=1 // pred_region
      %50 = dma.done [#allocation3], 256
    $region17: #{tpu_custom_call.1} parent=1 // pred_fallthru
      _
    // Predicated region
    $region18: #{tpu_custom_call.1} parent=1 // pred_check
      _
    $region19: #{tpu_custom_call.1} parent=1 // pred_check_branch
      %52 = sbr.rel (0) target = $region21
    $region20: #{tpu_custom_call.1} parent=1 // pred_region
      %53 = dma.done [#allocation6], 16384
    $region21: #{tpu_custom_call.1} parent=1 // pred_fallthru
      _
    // Predicated region
    $region22: #{tpu_custom_call.1} parent=1 // pred_check
      _
    $region23: #{tpu_custom_call.1} parent=1 // pred_check_branch
      %55 = sbr.rel (0) target = $region25
    $region24: #{tpu_custom_call.1} parent=1 // pred_region
      %56 = dma.done [#allocation6], 128
    $region25: #{tpu_custom_call.1} parent=1 // pred_fallthru
      _
    %v57 = vld [vmem:[#allocation2] sm:$0xff]
    %v58 = vld [vmem:[#allocation2 + $0x8] sm:$0xff]
    %v59 = vld [vmem:[#allocation5] sm:$0xff]
    %v60 = vld [vmem:[#allocation5 + $0x8] sm:$0xff]
    %v61 = vld [vmem:[#allocation5 + $0x10] sm:$0xff]
    %v62 = vld [vmem:[#allocation5 + $0x18] sm:$0xff]
    %v63 = vld [vmem:[#allocation5 + $0x20] sm:$0xff]
    %v64 = vld [vmem:[#allocation5 + $0x28] sm:$0xff]
    %v65 = vld [vmem:[#allocation5 + $0x30] sm:$0xff]
    %v66 = vld [vmem:[#allocation5 + $0x38] sm:$0xff]
    %v67 = vld [vmem:[#allocation5 + $0x40] sm:$0xff]
    %v68 = vld [vmem:[#allocation5 + $0x48] sm:$0xff]
    %v69 = vld [vmem:[#allocation5 + $0x50] sm:$0xff]
    %v70 = vld [vmem:[#allocation5 + $0x58] sm:$0xff]
    %v71 = vld [vmem:[#allocation5 + $0x60] sm:$0xff]
    %v72 = vld [vmem:[#allocation5 + $0x68] sm:$0xff]
    %v73 = vld [vmem:[#allocation5 + $0x70] sm:$0xff]
    %v74 = vld [vmem:[#allocation5 + $0x78] sm:$0xff]
    %v75 = vld [vmem:[#allocation5 + $0x80] sm:$0xff]
    %v76 = vld [vmem:[#allocation5 + $0x88] sm:$0xff]
    %v77 = vld [vmem:[#allocation5 + $0x90] sm:$0xff]
    %v78 = vld [vmem:[#allocation5 + $0x98] sm:$0xff]
    %v79 = vld [vmem:[#allocation5 + $0xa0] sm:$0xff]
    %v80 = vld [vmem:[#allocation5 + $0xa8] sm:$0xff]
    %v81 = vld [vmem:[#allocation5 + $0xb0] sm:$0xff]
    %v82 = vld [vmem:[#allocation5 + $0xb8] sm:$0xff]
    %v83 = vld [vmem:[#allocation5 + $0xc0] sm:$0xff]
    %v84 = vld [vmem:[#allocation5 + $0xc8] sm:$0xff]
    %v85 = vld [vmem:[#allocation5 + $0xd0] sm:$0xff]
    %v86 = vld [vmem:[#allocation5 + $0xd8] sm:$0xff]
    %v87 = vld [vmem:[#allocation5 + $0xe0] sm:$0xff]
    %v88 = vld [vmem:[#allocation5 + $0xe8] sm:$0xff]
    %v89 = vld [vmem:[#allocation5 + $0xf0] sm:$0xff]
    %v90 = vld [vmem:[#allocation5 + $0xf8] sm:$0xff]
    %v91 = vld [vmem:[#allocation5 + $0x100] sm:$0xff]
    %v92 = vld [vmem:[#allocation5 + $0x108] sm:$0xff]
    %v93 = vld [vmem:[#allocation5 + $0x110] sm:$0xff]
    %v94 = vld [vmem:[#allocation5 + $0x118] sm:$0xff]
    %v95 = vld [vmem:[#allocation5 + $0x120] sm:$0xff]
    %v96 = vld [vmem:[#allocation5 + $0x128] sm:$0xff]
    %v97 = vld [vmem:[#allocation5 + $0x130] sm:$0xff]
    %v98 = vld [vmem:[#allocation5 + $0x138] sm:$0xff]
    %v99 = vld [vmem:[#allocation5 + $0x140] sm:$0xff]
    %v100 = vld [vmem:[#allocation5 + $0x148] sm:$0xff]
    %v101 = vld [vmem:[#allocation5 + $0x150] sm:$0xff]
    %v102 = vld [vmem:[#allocation5 + $0x158] sm:$0xff]
    %v103 = vld [vmem:[#allocation5 + $0x160] sm:$0xff]
    %v104 = vld [vmem:[#allocation5 + $0x168] sm:$0xff]
    %v105 = vld [vmem:[#allocation5 + $0x170] sm:$0xff]
    %v106 = vld [vmem:[#allocation5 + $0x178] sm:$0xff]
    %v107 = vld [vmem:[#allocation5 + $0x180] sm:$0xff]
    %v108 = vld [vmem:[#allocation5 + $0x188] sm:$0xff]
    %v109 = vld [vmem:[#allocation5 + $0x190] sm:$0xff]
    %v110 = vld [vmem:[#allocation5 + $0x198] sm:$0xff]
    %v111 = vld [vmem:[#allocation5 + $0x1a0] sm:$0xff]
    %v112 = vld [vmem:[#allocation5 + $0x1a8] sm:$0xff]
    %v113 = vld [vmem:[#allocation5 + $0x1b0] sm:$0xff]
    %v114 = vld [vmem:[#allocation5 + $0x1b8] sm:$0xff]
    %v115 = vld [vmem:[#allocation5 + $0x1c0] sm:$0xff]
    %v116 = vld [vmem:[#allocation5 + $0x1c8] sm:$0xff]
    %v117 = vld [vmem:[#allocation5 + $0x1d0] sm:$0xff]
    %v118 = vld [vmem:[#allocation5 + $0x1d8] sm:$0xff]
    %v119 = vld [vmem:[#allocation5 + $0x1e0] sm:$0xff]
    %v120 = vld [vmem:[#allocation5 + $0x1e8] sm:$0xff]
    %v121 = vld [vmem:[#allocation5 + $0x1f0] sm:$0xff]
    %v122 = vld [vmem:[#allocation5 + $0x1f8] sm:$0xff]
    %v123 = vld [vmem:[#allocation5 + $0x200] sm:$0xff]
    %v124 = vld [vmem:[#allocation5 + $0x208] sm:$0xff]
    %v125 = vld [vmem:[#allocation5 + $0x210] sm:$0xff]
    %v126 = vld [vmem:[#allocation5 + $0x218] sm:$0xff]
    %v127 = vld [vmem:[#allocation5 + $0x220] sm:$0xff]
    %v128 = vld [vmem:[#allocation5 + $0x228] sm:$0xff]
    %v129 = vld [vmem:[#allocation5 + $0x230] sm:$0xff]
    %v130 = vld [vmem:[#allocation5 + $0x238] sm:$0xff]
    %v131 = vld [vmem:[#allocation5 + $0x240] sm:$0xff]
    %v132 = vld [vmem:[#allocation5 + $0x248] sm:$0xff]
    %v133 = vld [vmem:[#allocation5 + $0x250] sm:$0xff]
    %v134 = vld [vmem:[#allocation5 + $0x258] sm:$0xff]
    %v135 = vld [vmem:[#allocation5 + $0x260] sm:$0xff]
    %v136 = vld [vmem:[#allocation5 + $0x268] sm:$0xff]
    %v137 = vld [vmem:[#allocation5 + $0x270] sm:$0xff]
    %v138 = vld [vmem:[#allocation5 + $0x278] sm:$0xff]
    %v139 = vld [vmem:[#allocation5 + $0x280] sm:$0xff]
    %v140 = vld [vmem:[#allocation5 + $0x288] sm:$0xff]
    %v141 = vld [vmem:[#allocation5 + $0x290] sm:$0xff]
    %v142 = vld [vmem:[#allocation5 + $0x298] sm:$0xff]
    %v143 = vld [vmem:[#allocation5 + $0x2a0] sm:$0xff]
    %v144 = vld [vmem:[#allocation5 + $0x2a8] sm:$0xff]
    %v145 = vld [vmem:[#allocation5 + $0x2b0] sm:$0xff]
    %v146 = vld [vmem:[#allocation5 + $0x2b8] sm:$0xff]
    %v147 = vld [vmem:[#allocation5 + $0x2c0] sm:$0xff]
    %v148 = vld [vmem:[#allocation5 + $0x2c8] sm:$0xff]
    %v149 = vld [vmem:[#allocation5 + $0x2d0] sm:$0xff]
    %v150 = vld [vmem:[#allocation5 + $0x2d8] sm:$0xff]
    %v151 = vld [vmem:[#allocation5 + $0x2e0] sm:$0xff]
    %v152 = vld [vmem:[#allocation5 + $0x2e8] sm:$0xff]
    %v153 = vld [vmem:[#allocation5 + $0x2f0] sm:$0xff]
    %v154 = vld [vmem:[#allocation5 + $0x2f8] sm:$0xff]
    %v155 = vld [vmem:[#allocation5 + $0x300] sm:$0xff]
    %v156 = vld [vmem:[#allocation5 + $0x308] sm:$0xff]
    %v157 = vld [vmem:[#allocation5 + $0x310] sm:$0xff]
    %v158 = vld [vmem:[#allocation5 + $0x318] sm:$0xff]
    %v159 = vld [vmem:[#allocation5 + $0x320] sm:$0xff]
    %v160 = vld [vmem:[#allocation5 + $0x328] sm:$0xff]
    %v161 = vld [vmem:[#allocation5 + $0x330] sm:$0xff]
    %v162 = vld [vmem:[#allocation5 + $0x338] sm:$0xff]
    %v163 = vld [vmem:[#allocation5 + $0x340] sm:$0xff]
    %v164 = vld [vmem:[#allocation5 + $0x348] sm:$0xff]
    %v165 = vld [vmem:[#allocation5 + $0x350] sm:$0xff]
    %v166 = vld [vmem:[#allocation5 + $0x358] sm:$0xff]
    %v167 = vld [vmem:[#allocation5 + $0x360] sm:$0xff]
    %v168 = vld [vmem:[#allocation5 + $0x368] sm:$0xff]
    %v169 = vld [vmem:[#allocation5 + $0x370] sm:$0xff]
    %v170 = vld [vmem:[#allocation5 + $0x378] sm:$0xff]
    %v171 = vld [vmem:[#allocation5 + $0x380] sm:$0xff]
    %v172 = vld [vmem:[#allocation5 + $0x388] sm:$0xff]
    %v173 = vld [vmem:[#allocation5 + $0x390] sm:$0xff]
    %v174 = vld [vmem:[#allocation5 + $0x398] sm:$0xff]
    %v175 = vld [vmem:[#allocation5 + $0x3a0] sm:$0xff]
    %v176 = vld [vmem:[#allocation5 + $0x3a8] sm:$0xff]
    %v177 = vld [vmem:[#allocation5 + $0x3b0] sm:$0xff]
    %v178 = vld [vmem:[#allocation5 + $0x3b8] sm:$0xff]
    %v179 = vld [vmem:[#allocation5 + $0x3c0] sm:$0xff]
    %v180 = vld [vmem:[#allocation5 + $0x3c8] sm:$0xff]
    %v181 = vld [vmem:[#allocation5 + $0x3d0] sm:$0xff]
    %v182 = vld [vmem:[#allocation5 + $0x3d8] sm:$0xff]
    %v183 = vld [vmem:[#allocation5 + $0x3e0] sm:$0xff]
    %v184 = vld [vmem:[#allocation5 + $0x3e8] sm:$0xff]
    %v185 = vld [vmem:[#allocation5 + $0x3f0] sm:$0xff]
    %v186 = vld [vmem:[#allocation5 + $0x3f8] sm:$0xff]
    %v187 = vld [vmem:[#allocation7] sm:$0xff]
    %v189 = vlaneseq
    %v190 = vshrl.u32 %v189, 7
    %v191 = vsub.s32 0, %v190
    %v192 = vrot.slane %v187, %v191
    %v193 = vlaneseq
    %v194 = vshrl.u32 %v193, 7
    %v195 = vsub.s32 1, %v194
    %v196 = vrot.slane %v187, %v195
    %v197 = vlaneseq
    %v198 = vshrl.u32 %v197, 7
    %v199 = vsub.s32 2, %v198
    %v200 = vrot.slane %v187, %v199
    %v201 = vlaneseq
    %v202 = vshrl.u32 %v201, 7
    %v203 = vsub.s32 3, %v202
    %v204 = vrot.slane %v187, %v203
    %v205 = vlaneseq
    %v206 = vshrl.u32 %v205, 7
    %v207 = vsub.s32 4, %v206
    %v208 = vrot.slane %v187, %v207
    %v209 = vlaneseq
    %v210 = vshrl.u32 %v209, 7
    %v211 = vsub.s32 5, %v210
    %v212 = vrot.slane %v187, %v211
    %v213 = vlaneseq
    %v214 = vshrl.u32 %v213, 7
    %v215 = vsub.s32 6, %v214
    %v216 = vrot.slane %v187, %v215
    %v217 = vlaneseq
    %v218 = vshrl.u32 %v217, 7
    %v219 = vsub.s32 7, %v218
    %v220 = vrot.slane %v187, %v219
    %v231 = vunpack.c.l.b16 %v57
    %v232 = vunpack.c.h.b16 %v57
    %v233 = vunpack.c.l.b16 %v58
    %v234 = vunpack.c.h.b16 %v58
    %v235 = vpack.c.b16 %v233, %v231
    %v236 = vpack.c.b16 %v234, %v232
    %v367 = vunpack.c.l.b16 %v59
    %v368 = vunpack.c.h.b16 %v59
    %v369 = vunpack.c.l.b16 %v60
    %v370 = vunpack.c.h.b16 %v60
    %v371 = vunpack.c.l.b16 %v61
    %v372 = vunpack.c.h.b16 %v61
    %v373 = vunpack.c.l.b16 %v62
    %v374 = vunpack.c.h.b16 %v62
    %v375 = vunpack.c.l.b16 %v63
    %v376 = vunpack.c.h.b16 %v63
    %v377 = vunpack.c.l.b16 %v64
    %v378 = vunpack.c.h.b16 %v64
    %v379 = vunpack.c.l.b16 %v65
    %v380 = vunpack.c.h.b16 %v65
    %v381 = vunpack.c.l.b16 %v66
    %v382 = vunpack.c.h.b16 %v66
    %v383 = vunpack.c.l.b16 %v67
    %v384 = vunpack.c.h.b16 %v67
    %v385 = vunpack.c.l.b16 %v68
    %v386 = vunpack.c.h.b16 %v68
    %v387 = vunpack.c.l.b16 %v69
    %v388 = vunpack.c.h.b16 %v69
    %v389 = vunpack.c.l.b16 %v70
    %v390 = vunpack.c.h.b16 %v70
    %v391 = vunpack.c.l.b16 %v71
    %v392 = vunpack.c.h.b16 %v71
    %v393 = vunpack.c.l.b16 %v72
    %v394 = vunpack.c.h.b16 %v72
    %v395 = vunpack.c.l.b16 %v73
    %v396 = vunpack.c.h.b16 %v73
    %v397 = vunpack.c.l.b16 %v74
    %v398 = vunpack.c.h.b16 %v74
    %v399 = vunpack.c.l.b16 %v75
    %v400 = vunpack.c.h.b16 %v75
    %v401 = vunpack.c.l.b16 %v76
    %v402 = vunpack.c.h.b16 %v76
    %v403 = vunpack.c.l.b16 %v77
    %v404 = vunpack.c.h.b16 %v77
    %v405 = vunpack.c.l.b16 %v78
    %v406 = vunpack.c.h.b16 %v78
    %v407 = vunpack.c.l.b16 %v79
    %v408 = vunpack.c.h.b16 %v79
    %v409 = vunpack.c.l.b16 %v80
    %v410 = vunpack.c.h.b16 %v80
    %v411 = vunpack.c.l.b16 %v81
    %v412 = vunpack.c.h.b16 %v81
    %v413 = vunpack.c.l.b16 %v82
    %v414 = vunpack.c.h.b16 %v82
    %v415 = vunpack.c.l.b16 %v83
    %v416 = vunpack.c.h.b16 %v83
    %v417 = vunpack.c.l.b16 %v84
    %v418 = vunpack.c.h.b16 %v84
    %v419 = vunpack.c.l.b16 %v85
    %v420 = vunpack.c.h.b16 %v85
    %v421 = vunpack.c.l.b16 %v86
    %v422 = vunpack.c.h.b16 %v86
    %v423 = vunpack.c.l.b16 %v87
    %v424 = vunpack.c.h.b16 %v87
    %v425 = vunpack.c.l.b16 %v88
    %v426 = vunpack.c.h.b16 %v88
    %v427 = vunpack.c.l.b16 %v89
    %v428 = vunpack.c.h.b16 %v89
    %v429 = vunpack.c.l.b16 %v90
    %v430 = vunpack.c.h.b16 %v90
    %v431 = vunpack.c.l.b16 %v91
    %v432 = vunpack.c.h.b16 %v91
    %v433 = vunpack.c.l.b16 %v92
    %v434 = vunpack.c.h.b16 %v92
    %v435 = vunpack.c.l.b16 %v93
    %v436 = vunpack.c.h.b16 %v93
    %v437 = vunpack.c.l.b16 %v94
    %v438 = vunpack.c.h.b16 %v94
    %v439 = vunpack.c.l.b16 %v95
    %v440 = vunpack.c.h.b16 %v95
    %v441 = vunpack.c.l.b16 %v96
    %v442 = vunpack.c.h.b16 %v96
    %v443 = vunpack.c.l.b16 %v97
    %v444 = vunpack.c.h.b16 %v97
    %v445 = vunpack.c.l.b16 %v98
    %v446 = vunpack.c.h.b16 %v98
    %v447 = vunpack.c.l.b16 %v99
    %v448 = vunpack.c.h.b16 %v99
    %v449 = vunpack.c.l.b16 %v100
    %v450 = vunpack.c.h.b16 %v100
    %v451 = vunpack.c.l.b16 %v101
    %v452 = vunpack.c.h.b16 %v101
    %v453 = vunpack.c.l.b16 %v102
    %v454 = vunpack.c.h.b16 %v102
    %v455 = vunpack.c.l.b16 %v103
    %v456 = vunpack.c.h.b16 %v103
    %v457 = vunpack.c.l.b16 %v104
    %v458 = vunpack.c.h.b16 %v104
    %v459 = vunpack.c.l.b16 %v105
    %v460 = vunpack.c.h.b16 %v105
    %v461 = vunpack.c.l.b16 %v106
    %v462 = vunpack.c.h.b16 %v106
    %v463 = vunpack.c.l.b16 %v107
    %v464 = vunpack.c.h.b16 %v107
    %v465 = vunpack.c.l.b16 %v108
    %v466 = vunpack.c.h.b16 %v108
    %v467 = vunpack.c.l.b16 %v109
    %v468 = vunpack.c.h.b16 %v109
    %v469 = vunpack.c.l.b16 %v110
    %v470 = vunpack.c.h.b16 %v110
    %v471 = vunpack.c.l.b16 %v111
    %v472 = vunpack.c.h.b16 %v111
    %v473 = vunpack.c.l.b16 %v112
    %v474 = vunpack.c.h.b16 %v112
    %v475 = vunpack.c.l.b16 %v113
    %v476 = vunpack.c.h.b16 %v113
    %v477 = vunpack.c.l.b16 %v114
    %v478 = vunpack.c.h.b16 %v114
    %v479 = vunpack.c.l.b16 %v115
    %v480 = vunpack.c.h.b16 %v115
    %v481 = vunpack.c.l.b16 %v116
    %v482 = vunpack.c.h.b16 %v116
    %v483 = vunpack.c.l.b16 %v117
    %v484 = vunpack.c.h.b16 %v117
    %v485 = vunpack.c.l.b16 %v118
    %v486 = vunpack.c.h.b16 %v118
    %v487 = vunpack.c.l.b16 %v119
    %v488 = vunpack.c.h.b16 %v119
    %v489 = vunpack.c.l.b16 %v120
    %v490 = vunpack.c.h.b16 %v120
    %v491 = vunpack.c.l.b16 %v121
    %v492 = vunpack.c.h.b16 %v121
    %v493 = vunpack.c.l.b16 %v122
    %v494 = vunpack.c.h.b16 %v122
    %v495 = vunpack.c.l.b16 %v123
    %v496 = vunpack.c.h.b16 %v123
    %v497 = vunpack.c.l.b16 %v124
    %v498 = vunpack.c.h.b16 %v124
    %v499 = vunpack.c.l.b16 %v125
    %v500 = vunpack.c.h.b16 %v125
    %v501 = vunpack.c.l.b16 %v126
    %v502 = vunpack.c.h.b16 %v126
    %v503 = vunpack.c.l.b16 %v127
    %v504 = vunpack.c.h.b16 %v127
    %v505 = vunpack.c.l.b16 %v128
    %v506 = vunpack.c.h.b16 %v128
    %v507 = vunpack.c.l.b16 %v129
    %v508 = vunpack.c.h.b16 %v129
    %v509 = vunpack.c.l.b16 %v130
    %v510 = vunpack.c.h.b16 %v130
    %v511 = vunpack.c.l.b16 %v131
    %v512 = vunpack.c.h.b16 %v131
    %v513 = vunpack.c.l.b16 %v132
    %v514 = vunpack.c.h.b16 %v132
    %v515 = vunpack.c.l.b16 %v133
    %v516 = vunpack.c.h.b16 %v133
    %v517 = vunpack.c.l.b16 %v134
    %v518 = vunpack.c.h.b16 %v134
    %v519 = vunpack.c.l.b16 %v135
    %v520 = vunpack.c.h.b16 %v135
    %v521 = vunpack.c.l.b16 %v136
    %v522 = vunpack.c.h.b16 %v136
    %v523 = vunpack.c.l.b16 %v137
    %v524 = vunpack.c.h.b16 %v137
    %v525 = vunpack.c.l.b16 %v138
    %v526 = vunpack.c.h.b16 %v138
    %v527 = vunpack.c.l.b16 %v139
    %v528 = vunpack.c.h.b16 %v139
    %v529 = vunpack.c.l.b16 %v140
    %v530 = vunpack.c.h.b16 %v140
    %v531 = vunpack.c.l.b16 %v141
    %v532 = vunpack.c.h.b16 %v141
    %v533 = vunpack.c.l.b16 %v142
    %v534 = vunpack.c.h.b16 %v142
    %v535 = vunpack.c.l.b16 %v143
    %v536 = vunpack.c.h.b16 %v143
    %v537 = vunpack.c.l.b16 %v144
    %v538 = vunpack.c.h.b16 %v144
    %v539 = vunpack.c.l.b16 %v145
    %v540 = vunpack.c.h.b16 %v145
    %v541 = vunpack.c.l.b16 %v146
    %v542 = vunpack.c.h.b16 %v146
    %v543 = vunpack.c.l.b16 %v147
    %v544 = vunpack.c.h.b16 %v147
    %v545 = vunpack.c.l.b16 %v148
    %v546 = vunpack.c.h.b16 %v148
    %v547 = vunpack.c.l.b16 %v149
    %v548 = vunpack.c.h.b16 %v149
    %v549 = vunpack.c.l.b16 %v150
    %v550 = vunpack.c.h.b16 %v150
    %v551 = vunpack.c.l.b16 %v151
    %v552 = vunpack.c.h.b16 %v151
    %v553 = vunpack.c.l.b16 %v152
    %v554 = vunpack.c.h.b16 %v152
    %v555 = vunpack.c.l.b16 %v153
    %v556 = vunpack.c.h.b16 %v153
    %v557 = vunpack.c.l.b16 %v154
    %v558 = vunpack.c.h.b16 %v154
    %v559 = vunpack.c.l.b16 %v155
    %v560 = vunpack.c.h.b16 %v155
    %v561 = vunpack.c.l.b16 %v156
    %v562 = vunpack.c.h.b16 %v156
    %v563 = vunpack.c.l.b16 %v157
    %v564 = vunpack.c.h.b16 %v157
    %v565 = vunpack.c.l.b16 %v158
    %v566 = vunpack.c.h.b16 %v158
    %v567 = vunpack.c.l.b16 %v159
    %v568 = vunpack.c.h.b16 %v159
    %v569 = vunpack.c.l.b16 %v160
    %v570 = vunpack.c.h.b16 %v160
    %v571 = vunpack.c.l.b16 %v161
    %v572 = vunpack.c.h.b16 %v161
    %v573 = vunpack.c.l.b16 %v162
    %v574 = vunpack.c.h.b16 %v162
    %v575 = vunpack.c.l.b16 %v163
    %v576 = vunpack.c.h.b16 %v163
    %v577 = vunpack.c.l.b16 %v164
    %v578 = vunpack.c.h.b16 %v164
    %v579 = vunpack.c.l.b16 %v165
    %v580 = vunpack.c.h.b16 %v165
    %v581 = vunpack.c.l.b16 %v166
    %v582 = vunpack.c.h.b16 %v166
    %v583 = vunpack.c.l.b16 %v167
    %v584 = vunpack.c.h.b16 %v167
    %v585 = vunpack.c.l.b16 %v168
    %v586 = vunpack.c.h.b16 %v168
    %v587 = vunpack.c.l.b16 %v169
    %v588 = vunpack.c.h.b16 %v169
    %v589 = vunpack.c.l.b16 %v170
    %v590 = vunpack.c.h.b16 %v170
    %v591 = vunpack.c.l.b16 %v171
    %v592 = vunpack.c.h.b16 %v171
    %v593 = vunpack.c.l.b16 %v172
    %v594 = vunpack.c.h.b16 %v172
    %v595 = vunpack.c.l.b16 %v173
    %v596 = vunpack.c.h.b16 %v173
    %v597 = vunpack.c.l.b16 %v174
    %v598 = vunpack.c.h.b16 %v174
    %v599 = vunpack.c.l.b16 %v175
    %v600 = vunpack.c.h.b16 %v175
    %v601 = vunpack.c.l.b16 %v176
    %v602 = vunpack.c.h.b16 %v176
    %v603 = vunpack.c.l.b16 %v177
    %v604 = vunpack.c.h.b16 %v177
    %v605 = vunpack.c.l.b16 %v178
    %v606 = vunpack.c.h.b16 %v178
    %v607 = vunpack.c.l.b16 %v179
    %v608 = vunpack.c.h.b16 %v179
    %v609 = vunpack.c.l.b16 %v180
    %v610 = vunpack.c.h.b16 %v180
    %v611 = vunpack.c.l.b16 %v181
    %v612 = vunpack.c.h.b16 %v181
    %v613 = vunpack.c.l.b16 %v182
    %v614 = vunpack.c.h.b16 %v182
    %v615 = vunpack.c.l.b16 %v183
    %v616 = vunpack.c.h.b16 %v183
    %v617 = vunpack.c.l.b16 %v184
    %v618 = vunpack.c.h.b16 %v184
    %v619 = vunpack.c.l.b16 %v185
    %v620 = vunpack.c.h.b16 %v185
    %v621 = vunpack.c.l.b16 %v186
    %v622 = vunpack.c.h.b16 %v186
    %v623 = vpack.c.b16 %v375, %v367
    %v624 = vpack.c.b16 %v376, %v368
    %v625 = vpack.c.b16 %v377, %v369
    %v626 = vpack.c.b16 %v378, %v370
    %v627 = vpack.c.b16 %v379, %v371
    %v628 = vpack.c.b16 %v380, %v372
    %v629 = vpack.c.b16 %v381, %v373
    %v630 = vpack.c.b16 %v382, %v374
    %v631 = vpack.c.b16 %v391, %v383
    %v632 = vpack.c.b16 %v392, %v384
    %v633 = vpack.c.b16 %v393, %v385
    %v634 = vpack.c.b16 %v394, %v386
    %v635 = vpack.c.b16 %v395, %v387
    %v636 = vpack.c.b16 %v396, %v388
    %v637 = vpack.c.b16 %v397, %v389
    %v638 = vpack.c.b16 %v398, %v390
    %v639 = vpack.c.b16 %v407, %v399
    %v640 = vpack.c.b16 %v408, %v400
    %v641 = vpack.c.b16 %v409, %v401
    %v642 = vpack.c.b16 %v410, %v402
    %v643 = vpack.c.b16 %v411, %v403
    %v644 = vpack.c.b16 %v412, %v404
    %v645 = vpack.c.b16 %v413, %v405
    %v646 = vpack.c.b16 %v414, %v406
    %v647 = vpack.c.b16 %v423, %v415
    %v648 = vpack.c.b16 %v424, %v416
    %v649 = vpack.c.b16 %v425, %v417
    %v650 = vpack.c.b16 %v426, %v418
    %v651 = vpack.c.b16 %v427, %v419
    %v652 = vpack.c.b16 %v428, %v420
    %v653 = vpack.c.b16 %v429, %v421
    %v654 = vpack.c.b16 %v430, %v422
    %v655 = vpack.c.b16 %v439, %v431
    %v656 = vpack.c.b16 %v440, %v432
    %v657 = vpack.c.b16 %v441, %v433
    %v658 = vpack.c.b16 %v442, %v434
    %v659 = vpack.c.b16 %v443, %v435
    %v660 = vpack.c.b16 %v444, %v436
    %v661 = vpack.c.b16 %v445, %v437
    %v662 = vpack.c.b16 %v446, %v438
    %v663 = vpack.c.b16 %v455, %v447
    %v664 = vpack.c.b16 %v456, %v448
    %v665 = vpack.c.b16 %v457, %v449
    %v666 = vpack.c.b16 %v458, %v450
    %v667 = vpack.c.b16 %v459, %v451
    %v668 = vpack.c.b16 %v460, %v452
    %v669 = vpack.c.b16 %v461, %v453
    %v670 = vpack.c.b16 %v462, %v454
    %v671 = vpack.c.b16 %v471, %v463
    %v672 = vpack.c.b16 %v472, %v464
    %v673 = vpack.c.b16 %v473, %v465
    %v674 = vpack.c.b16 %v474, %v466
    %v675 = vpack.c.b16 %v475, %v467
    %v676 = vpack.c.b16 %v476, %v468
    %v677 = vpack.c.b16 %v477, %v469
    %v678 = vpack.c.b16 %v478, %v470
    %v679 = vpack.c.b16 %v487, %v479
    %v680 = vpack.c.b16 %v488, %v480
    %v681 = vpack.c.b16 %v489, %v481
    %v682 = vpack.c.b16 %v490, %v482
    %v683 = vpack.c.b16 %v491, %v483
    %v684 = vpack.c.b16 %v492, %v484
    %v685 = vpack.c.b16 %v493, %v485
    %v686 = vpack.c.b16 %v494, %v486
    %v687 = vpack.c.b16 %v503, %v495
    %v688 = vpack.c.b16 %v504, %v496
    %v689 = vpack.c.b16 %v505, %v497
    %v690 = vpack.c.b16 %v506, %v498
    %v691 = vpack.c.b16 %v507, %v499
    %v692 = vpack.c.b16 %v508, %v500
    %v693 = vpack.c.b16 %v509, %v501
    %v694 = vpack.c.b16 %v510, %v502
    %v695 = vpack.c.b16 %v519, %v511
    %v696 = vpack.c.b16 %v520, %v512
    %v697 = vpack.c.b16 %v521, %v513
    %v698 = vpack.c.b16 %v522, %v514
    %v699 = vpack.c.b16 %v523, %v515
    %v700 = vpack.c.b16 %v524, %v516
    %v701 = vpack.c.b16 %v525, %v517
    %v702 = vpack.c.b16 %v526, %v518
    %v703 = vpack.c.b16 %v535, %v527
    %v704 = vpack.c.b16 %v536, %v528
    %v705 = vpack.c.b16 %v537, %v529
    %v706 = vpack.c.b16 %v538, %v530
    %v707 = vpack.c.b16 %v539, %v531
    %v708 = vpack.c.b16 %v540, %v532
    %v709 = vpack.c.b16 %v541, %v533
    %v710 = vpack.c.b16 %v542, %v534
    %v711 = vpack.c.b16 %v551, %v543
    %v712 = vpack.c.b16 %v552, %v544
    %v713 = vpack.c.b16 %v553, %v545
    %v714 = vpack.c.b16 %v554, %v546
    %v715 = vpack.c.b16 %v555, %v547
    %v716 = vpack.c.b16 %v556, %v548
    %v717 = vpack.c.b16 %v557, %v549
    %v718 = vpack.c.b16 %v558, %v550
    %v719 = vpack.c.b16 %v567, %v559
    %v720 = vpack.c.b16 %v568, %v560
    %v721 = vpack.c.b16 %v569, %v561
    %v722 = vpack.c.b16 %v570, %v562
    %v723 = vpack.c.b16 %v571, %v563
    %v724 = vpack.c.b16 %v572, %v564
    %v725 = vpack.c.b16 %v573, %v565
    %v726 = vpack.c.b16 %v574, %v566
    %v727 = vpack.c.b16 %v583, %v575
    %v728 = vpack.c.b16 %v584, %v576
    %v729 = vpack.c.b16 %v585, %v577
    %v730 = vpack.c.b16 %v586, %v578
    %v731 = vpack.c.b16 %v587, %v579
    %v732 = vpack.c.b16 %v588, %v580
    %v733 = vpack.c.b16 %v589, %v581
    %v734 = vpack.c.b16 %v590, %v582
    %v735 = vpack.c.b16 %v599, %v591
    %v736 = vpack.c.b16 %v600, %v592
    %v737 = vpack.c.b16 %v601, %v593
    %v738 = vpack.c.b16 %v602, %v594
    %v739 = vpack.c.b16 %v603, %v595
    %v740 = vpack.c.b16 %v604, %v596
    %v741 = vpack.c.b16 %v605, %v597
    %v742 = vpack.c.b16 %v606, %v598
    %v743 = vpack.c.b16 %v615, %v607
    %v744 = vpack.c.b16 %v616, %v608
    %v745 = vpack.c.b16 %v617, %v609
    %v746 = vpack.c.b16 %v618, %v610
    %v747 = vpack.c.b16 %v619, %v611
    %v748 = vpack.c.b16 %v620, %v612
    %v749 = vpack.c.b16 %v621, %v613
    %v750 = vpack.c.b16 %v622, %v614
    %879 = vmatprep.subr.bf16.mxu0 %v680
    %880 = vmatpush1.bf16.msra.mxu0 %v679
    %881 = vmatprep.subr.bf16.mxu0 %v672
    %882 = vmatpush1.bf16.msra.mxu0 %v671
    %883 = vmatprep.subr.bf16.mxu0 %v664
    %884 = vmatpush1.bf16.msra.mxu0 %v663
    %885 = vmatprep.subr.bf16.mxu0 %v656
    %886 = vmatpush1.bf16.msra.mxu0 %v655
    %887 = vmatprep.subr.bf16.mxu0 %v648
    %888 = vmatpush1.bf16.msra.mxu0 %v647
    %889 = vmatprep.subr.bf16.mxu0 %v640
    %890 = vmatpush1.bf16.msra.mxu0 %v639
    %891 = vmatprep.subr.bf16.mxu0 %v632
    %892 = vmatpush1.bf16.msra.mxu0 %v631
    %893 = vmatprep.subr.bf16.mxu0 %v624
    %894 = vmatpush1.bf16.msra.mxu0 %v623
    %895 = vmatprep.subr.bf16.mxu0 %v744
    %896 = vmatpush2.bf16.msra.mxu0 %v743
    %897 = vmatprep.subr.bf16.mxu0 %v736
    %898 = vmatpush2.bf16.msra.mxu0 %v735
    %899 = vmatprep.subr.bf16.mxu0 %v728
    %900 = vmatpush2.bf16.msra.mxu0 %v727
    %901 = vmatprep.subr.bf16.mxu0 %v720
    %902 = vmatpush2.bf16.msra.mxu0 %v719
    %903 = vmatprep.subr.bf16.mxu0 %v712
    %904 = vmatpush2.bf16.msra.mxu0 %v711
    %905 = vmatprep.subr.bf16.mxu0 %v704
    %906 = vmatpush2.bf16.msra.mxu0 %v703
    %907 = vmatprep.subr.bf16.mxu0 %v696
    %908 = vmatpush2.bf16.msra.mxu0 %v695
    %909 = vmatprep.subr.bf16.mxu0 %v688
    %910 = vmatpush2.bf16.msra.mxu0 %v687
    %911 = vmatprep.mubr.bf16.mxu0 %v236
    %912 = vmatmul.mubr.bf16.gmra.mxu0 %v235
    %v913 = vpop.f32.mrf.mxu0
    %v914 = vadd.f32 %v192, %v913
    %v915 = vpop.f32.mrf.mxu0
    %v916 = vadd.f32 %v196, %v915
    %v917 = vpop.f32.mrf.mxu0
    %v918 = vadd.f32 %v192, %v917
    %v919 = vpop.f32.mrf.mxu0
    %v920 = vadd.f32 %v196, %v919
    %921 = vdwg.mxu0
    %922 = vmatprep.subr.bf16.mxu0 %v682
    %923 = vmatpush1.bf16.msra.mxu0 %v681
    %924 = vmatprep.subr.bf16.mxu0 %v674
    %925 = vmatpush1.bf16.msra.mxu0 %v673
    %926 = vmatprep.subr.bf16.mxu0 %v666
    %927 = vmatpush1.bf16.msra.mxu0 %v665
    %928 = vmatprep.subr.bf16.mxu0 %v658
    %929 = vmatpush1.bf16.msra.mxu0 %v657
    %930 = vmatprep.subr.bf16.mxu0 %v650
    %931 = vmatpush1.bf16.msra.mxu0 %v649
    %932 = vmatprep.subr.bf16.mxu0 %v642
    %933 = vmatpush1.bf16.msra.mxu0 %v641
    %934 = vmatprep.subr.bf16.mxu0 %v634
    %935 = vmatpush1.bf16.msra.mxu0 %v633
    %936 = vmatprep.subr.bf16.mxu0 %v626
    %937 = vmatpush1.bf16.msra.mxu0 %v625
    %938 = vmatprep.subr.bf16.mxu0 %v746
    %939 = vmatpush2.bf16.msra.mxu0 %v745
    %940 = vmatprep.subr.bf16.mxu0 %v738
    %941 = vmatpush2.bf16.msra.mxu0 %v737
    %942 = vmatprep.subr.bf16.mxu0 %v730
    %943 = vmatpush2.bf16.msra.mxu0 %v729
    %944 = vmatprep.subr.bf16.mxu0 %v722
    %945 = vmatpush2.bf16.msra.mxu0 %v721
    %946 = vmatprep.subr.bf16.mxu0 %v714
    %947 = vmatpush2.bf16.msra.mxu0 %v713
    %948 = vmatprep.subr.bf16.mxu0 %v706
    %949 = vmatpush2.bf16.msra.mxu0 %v705
    %950 = vmatprep.subr.bf16.mxu0 %v698
    %951 = vmatpush2.bf16.msra.mxu0 %v697
    %952 = vmatprep.subr.bf16.mxu0 %v690
    %953 = vmatpush2.bf16.msra.mxu0 %v689
    %954 = vmatprep.mubr.bf16.mxu0 %v236
    %955 = vmatmul.mubr.bf16.gmra.mxu0 %v235
    %v956 = vpop.f32.mrf.mxu0
    %v957 = vadd.f32 %v200, %v956
    %v958 = vpop.f32.mrf.mxu0
    %v959 = vadd.f32 %v204, %v958
    %v960 = vpop.f32.mrf.mxu0
    %v961 = vadd.f32 %v200, %v960
    %v962 = vpop.f32.mrf.mxu0
    %v963 = vadd.f32 %v204, %v962
    %964 = vdwg.mxu0
    %965 = vmatprep.subr.bf16.mxu0 %v684
    %966 = vmatpush1.bf16.msra.mxu0 %v683
    %967 = vmatprep.subr.bf16.mxu0 %v676
    %968 = vmatpush1.bf16.msra.mxu0 %v675
    %969 = vmatprep.subr.bf16.mxu0 %v668
    %970 = vmatpush1.bf16.msra.mxu0 %v667
    %971 = vmatprep.subr.bf16.mxu0 %v660
    %972 = vmatpush1.bf16.msra.mxu0 %v659
    %973 = vmatprep.subr.bf16.mxu0 %v652
    %974 = vmatpush1.bf16.msra.mxu0 %v651
    %975 = vmatprep.subr.bf16.mxu0 %v644
    %976 = vmatpush1.bf16.msra.mxu0 %v643
    %977 = vmatprep.subr.bf16.mxu0 %v636
    %978 = vmatpush1.bf16.msra.mxu0 %v635
    %979 = vmatprep.subr.bf16.mxu0 %v628
    %980 = vmatpush1.bf16.msra.mxu0 %v627
    %981 = vmatprep.subr.bf16.mxu0 %v748
    %982 = vmatpush2.bf16.msra.mxu0 %v747
    %983 = vmatprep.subr.bf16.mxu0 %v740
    %984 = vmatpush2.bf16.msra.mxu0 %v739
    %985 = vmatprep.subr.bf16.mxu0 %v732
    %986 = vmatpush2.bf16.msra.mxu0 %v731
    %987 = vmatprep.subr.bf16.mxu0 %v724
    %988 = vmatpush2.bf16.msra.mxu0 %v723
    %989 = vmatprep.subr.bf16.mxu0 %v716
    %990 = vmatpush2.bf16.msra.mxu0 %v715
    %991 = vmatprep.subr.bf16.mxu0 %v708
    %992 = vmatpush2.bf16.msra.mxu0 %v707
    %993 = vmatprep.subr.bf16.mxu0 %v700
    %994 = vmatpush2.bf16.msra.mxu0 %v699
    %995 = vmatprep.subr.bf16.mxu0 %v692
    %996 = vmatpush2.bf16.msra.mxu0 %v691
    %997 = vmatprep.mubr.bf16.mxu0 %v236
    %998 = vmatmul.mubr.bf16.gmra.mxu0 %v235
    %v999 = vpop.f32.mrf.mxu0
    %v1000 = vadd.f32 %v208, %v999
    %v1001 = vpop.f32.mrf.mxu0
    %v1002 = vadd.f32 %v212, %v1001
    %v1003 = vpop.f32.mrf.mxu0
    %v1004 = vadd.f32 %v208, %v1003
    %v1005 = vpop.f32.mrf.mxu0
    %v1006 = vadd.f32 %v212, %v1005
    %1007 = vdwg.mxu0
    %1008 = vmatprep.subr.bf16.mxu0 %v686
    %1009 = vmatpush1.bf16.msra.mxu0 %v685
    %1010 = vmatprep.subr.bf16.mxu0 %v678
    %1011 = vmatpush1.bf16.msra.mxu0 %v677
    %1012 = vmatprep.subr.bf16.mxu0 %v670
    %1013 = vmatpush1.bf16.msra.mxu0 %v669
    %1014 = vmatprep.subr.bf16.mxu0 %v662
    %1015 = vmatpush1.bf16.msra.mxu0 %v661
    %1016 = vmatprep.subr.bf16.mxu0 %v654
    %1017 = vmatpush1.bf16.msra.mxu0 %v653
    %1018 = vmatprep.subr.bf16.mxu0 %v646
    %1019 = vmatpush1.bf16.msra.mxu0 %v645
    %1020 = vmatprep.subr.bf16.mxu0 %v638
    %1021 = vmatpush1.bf16.msra.mxu0 %v637
    %1022 = vmatprep.subr.bf16.mxu0 %v630
    %1023 = vmatpush1.bf16.msra.mxu0 %v629
    %1024 = vmatprep.subr.bf16.mxu0 %v750
    %1025 = vmatpush2.bf16.msra.mxu0 %v749
    %1026 = vmatprep.subr.bf16.mxu0 %v742
    %1027 = vmatpush2.bf16.msra.mxu0 %v741
    %1028 = vmatprep.subr.bf16.mxu0 %v734
    %1029 = vmatpush2.bf16.msra.mxu0 %v733
    %1030 = vmatprep.subr.bf16.mxu0 %v726
    %1031 = vmatpush2.bf16.msra.mxu0 %v725
    %1032 = vmatprep.subr.bf16.mxu0 %v718
    %1033 = vmatpush2.bf16.msra.mxu0 %v717
    %1034 = vmatprep.subr.bf16.mxu0 %v710
    %1035 = vmatpush2.bf16.msra.mxu0 %v709
    %1036 = vmatprep.subr.bf16.mxu0 %v702
    %1037 = vmatpush2.bf16.msra.mxu0 %v701
    %1038 = vmatprep.subr.bf16.mxu0 %v694
    %1039 = vmatpush2.bf16.msra.mxu0 %v693
    %1040 = vmatprep.mubr.bf16.mxu0 %v236
    %1041 = vmatmul.mubr.bf16.gmra.mxu0 %v235
    %v1042 = vpop.f32.mrf.mxu0
    %v1043 = vadd.f32 %v216, %v1042
    %v1044 = vpop.f32.mrf.mxu0
    %v1045 = vadd.f32 %v220, %v1044
    %v1046 = vpop.f32.mrf.mxu0
    %v1047 = vadd.f32 %v216, %v1046
    %v1048 = vpop.f32.mrf.mxu0
    %v1049 = vadd.f32 %v220, %v1048
    %1050 = vdwg.mxu0
    %v1051 = vpack.c.bf16 %v918, %v914
    %v1052 = vpack.c.bf16 %v920, %v916
    %v1053 = vpack.c.bf16 %v961, %v957
    %v1054 = vpack.c.bf16 %v963, %v959
    %v1059 = vunpack.c.l.b16 %v1051
    %v1060 = vunpack.c.l.b16 %v1052
    %v1061 = vunpack.c.l.b16 %v1053
    %v1062 = vunpack.c.l.b16 %v1054
    %v1063 = vunpack.c.h.b16 %v1051
    %v1064 = vunpack.c.h.b16 %v1052
    %v1065 = vunpack.c.h.b16 %v1053
    %v1066 = vunpack.c.h.b16 %v1054
    %v1067 = vpack.c.b16 %v1060, %v1059
    %v1068 = vpack.c.b16 %v1062, %v1061
    %v1069 = vpack.c.b16 %v1064, %v1063
    %v1070 = vpack.c.b16 %v1066, %v1065
    %1075 = vst [vmem:[#allocation8] sm:$0xff] %v1067
    %1076 = vst [vmem:[#allocation8 + $0x8] sm:$0xff] %v1068
    %1077 = vst [vmem:[#allocation8 + $0x10] sm:$0xff] %v1069
    %1078 = vst [vmem:[#allocation8 + $0x18] sm:$0xff] %v1070
    %v1079 = vpack.c.bf16 %v1004, %v1000
    %v1080 = vpack.c.bf16 %v1006, %v1002
    %v1081 = vpack.c.bf16 %v1047, %v1043
    %v1082 = vpack.c.bf16 %v1049, %v1045
    %v1087 = vunpack.c.l.b16 %v1079
    %v1088 = vunpack.c.l.b16 %v1080
    %v1089 = vunpack.c.l.b16 %v1081
    %v1090 = vunpack.c.l.b16 %v1082
    %v1091 = vunpack.c.h.b16 %v1079
    %v1092 = vunpack.c.h.b16 %v1080
    %v1093 = vunpack.c.h.b16 %v1081
    %v1094 = vunpack.c.h.b16 %v1082
    %v1095 = vpack.c.b16 %v1088, %v1087
    %v1096 = vpack.c.b16 %v1090, %v1089
    %v1097 = vpack.c.b16 %v1092, %v1091
    %v1098 = vpack.c.b16 %v1094, %v1093
    %1103 = vst [vmem:[#allocation9] sm:$0xff] %v1095
    %1104 = vst [vmem:[#allocation9 + $0x8] sm:$0xff] %v1096
    %1105 = vst [vmem:[#allocation9 + $0x10] sm:$0xff] %v1097
    %1106 = vst [vmem:[#allocation9 + $0x18] sm:$0xff] %v1098
    // Predicated region
    $region26: #{tpu_custom_call.1} parent=1 // pred_check
      _
    $region27: #{tpu_custom_call.1} parent=1 // pred_check_branch
      %1108 = sbr.rel (0) target = $region29
    $region28: #{tpu_custom_call.1} parent=1 // pred_region
      %s1110 = ssub.s32 512, 512
      %1111 = vsyncadd [#allocation4], %s1110
      %s1112 = sshll.u32 [#allocation8], 4
      %s1113 = int_to_ptr.vmem [resolvable:$true] %s1112
      %1118 = dma.vmem_to_hbm [thread:$0]  %s1113, 512, %s3, [#allocation4], 256, 256, 16
    $region29: #{tpu_custom_call.1} parent=1 // pred_fallthru
      _
    // Predicated region
    $region30: #{tpu_custom_call.1} parent=1 // pred_check
      _
    $region31: #{tpu_custom_call.1} parent=1 // pred_check_branch
      %1120 = sbr.rel (0) target = $region33
    $region32: #{tpu_custom_call.1} parent=1 // pred_region
      %s1122 = ssub.s32 512, 512
      %1123 = vsyncadd [#allocation10], %s1122
      %s1124 = sshll.u32 [#allocation9], 4
      %s1125 = int_to_ptr.vmem [resolvable:$true] %s1124
      %1130 = dma.vmem_to_hbm [thread:$0]  %s1125, 512, %s4, [#allocation10], 256, 256, 16
    $region33: #{tpu_custom_call.1} parent=1 // pred_fallthru
      _
    // Predicated region
    $region34: #{tpu_custom_call.1} parent=1 // pred_check
      _
    $region35: #{tpu_custom_call.1} parent=1 // pred_check_branch
      %1132 = sbr.rel (0) target = $region37
    $region36: #{tpu_custom_call.1} parent=1 // pred_region
      %1133 = dma.done [#allocation4], 512
    $region37: #{tpu_custom_call.1} parent=1 // pred_fallthru
      _
    // Predicated region
    $region38: #{tpu_custom_call.1} parent=1 // pred_check
      _
    $region39: #{tpu_custom_call.1} parent=1 // pred_check_branch
      %1135 = sbr.rel (0) target = $region41
    $region40: #{tpu_custom_call.1} parent=1 // pred_region
      %1136 = dma.done [#allocation10], 512
    $region41: #{tpu_custom_call.1} parent=1 // pred_fallthru
      _
    %1137 = vsyncpa [#allocation3], 1
    %1138 = vsyncpa [#allocation6], 1
    %1139 = vsyncpa [#allocation4], 1
    %1140 = vsyncpa [#allocation10], 1

</llo_original>
